<compile_context>
chip_gen: v5e
topology: v5e:2x2
jax: 0.10.0
libtpu: 0.0.40
codegen_flags: <defaults>
</compile_context>

<pallas_src>
import jax
import jax.numpy as jnp
import numpy as np
from jax.experimental import pallas as pl
from jax.experimental.pallas import tpu as pltpu


def vfe_kernel(x_ref, w_ref, b_ref, out_ref):
    # x_ref : (VBLK, T, Cin)  block of voxels
    # w_ref : (Cin, U)        BN-folded linear weight (for x @ W)
    # b_ref : (1, U)          BN-folded bias
    # out_ref: (VBLK, T, 2*U)
    vblk, t, cin = x_ref.shape
    u = w_ref.shape[1]

    # One big matmul over all points in the block (M = VBLK*T).
    x = x_ref[...].reshape(vblk * t, cin)
    h = jnp.dot(x.astype(jnp.float32), w_ref[...],
                preferred_element_type=jnp.float32)            # (VBLK*T, U)
    h = h + b_ref[...]                                         # folded BN bias
    pw = jnp.maximum(h, 0.0).reshape(vblk, t, u)               # ReLU, per-voxel view

    agg = jnp.max(pw, axis=1, keepdims=True)                   # (VBLK, 1, U)
    rep = jnp.broadcast_to(agg, (vblk, t, u))

    # Write the two halves directly; no concat temporary.
    out_ref[:, :, :u] = pw.astype(out_ref.dtype)
    out_ref[:, :, u:] = rep.astype(out_ref.dtype)


def vfe_layer(x, weight, gamma, beta, running_mean, running_var,
              *, vblk=1024, out_dtype=None):
    """x: (V, T, Cin); weight: (U, Cin) PyTorch-style; returns (V, T, 2*U)."""
    V, T, Cin = x.shape
    U = weight.shape[0]
    out_dtype = out_dtype or x.dtype

    # Fold BatchNorm (inference path) into the linear weight + bias:
    #   BN(x W^T) = x (W^T * s) + (beta - mean * s),  s = gamma / sqrt(var + eps)
    scale = gamma.astype(jnp.float32) * jax.lax.rsqrt(
        running_var.astype(jnp.float32) + 1e-3)
    w_folded = weight.T.astype(jnp.float32) * scale[None, :]          # (Cin, U)
    bias = (beta.astype(jnp.float32)
            - running_mean.astype(jnp.float32) * scale).reshape(1, U)

    # Batch voxels per grid step; pad V up to a multiple of VBLK.
    vblk = max(1, min(vblk, V))
    num_blocks = pl.cdiv(V, vblk)
    Vp = num_blocks * vblk
    if Vp != V:
        x = jnp.pad(x, ((0, Vp - V), (0, 0), (0, 0)))

    out = pl.pallas_call(
        vfe_kernel,
        out_shape=jax.ShapeDtypeStruct((Vp, T, 2 * U), out_dtype),
        grid_spec=pltpu.PrefetchScalarGridSpec(
            num_scalar_prefetch=0,
            grid=(num_blocks,),
            in_specs=[
                pl.BlockSpec((vblk, T, Cin), lambda i: (i, 0, 0)),
                pl.BlockSpec((Cin, U), lambda i: (0, 0)),   # weight stays resident
                pl.BlockSpec((1, U), lambda i: (0, 0)),     # bias stays resident
            ],
            out_specs=pl.BlockSpec((vblk, T, 2 * U), lambda i: (i, 0, 0)),
        ),
        compiler_params=pltpu.CompilerParams(
            dimension_semantics=("parallel",),          # megacore-shardable on v7x
            vmem_limit_bytes=32 * 1024 * 1024,          # safe on v5e/v6e/v7x
        ),
    )(x, w_folded, bias)

    return out[:V] if Vp != V else out


def vfe_reference(x, weight, gamma, beta, running_mean, running_var):
    h = jnp.einsum("vtc,uc->vtu", x, weight)
    h = (h - running_mean) * jax.lax.rsqrt(running_var + 1e-3) * gamma + beta
    pw = jnp.maximum(h, 0.0)
    agg = jnp.max(pw, axis=1, keepdims=True)
    rep = jnp.broadcast_to(agg, pw.shape)
    return jnp.concatenate([pw, rep], axis=-1)


if __name__ == "__main__":
    # Small shapes implied by the module: V voxels, T points per voxel,
    # in_channels Cin, out_channels Cout => U = Cout // 2.
    # V is deliberately NOT a multiple of vblk to exercise the padded-tail path,
    # and the grid has multiple steps to exercise pipelining.
    V, T, Cin, Cout = 50, 8, 16, 64
    U = Cout // 2
    VBLK = 16

    key = jax.random.PRNGKey(0)
    kx, kw, km, kv = jax.random.split(key, 4)
    x = jax.random.normal(kx, (V, T, Cin), dtype=jnp.float32)

    # Deterministic synthetic parameters (no checkpoint).
    weight = jax.random.normal(kw, (U, Cin), dtype=jnp.float32) * (1.0 / np.sqrt(Cin))
    gamma = jnp.full((U,), 1.1, dtype=jnp.float32)
    beta = jnp.full((U,), 0.05, dtype=jnp.float32)
    running_mean = 0.1 * jax.random.normal(km, (U,), dtype=jnp.float32)
    running_var = 1.0 + 0.1 * jnp.abs(jax.random.normal(kv, (U,), dtype=jnp.float32))

    out = vfe_layer(x, weight, gamma, beta, running_mean, running_var, vblk=VBLK)
    out = jax.block_until_ready(out)

    ref = vfe_reference(x, weight, gamma, beta, running_mean, running_var)
    assert out.shape == (V, T, Cout), out.shape
    np.testing.assert_allclose(np.asarray(out), np.asarray(ref), rtol=1e-5, atol=1e-5)

    print("KERNEL_OK")
</pallas_src>

<mosaic_0001>
module attributes {stable_mosaic.version = 11 : i64} {
  func.func @vfe_kernel(%arg0: i32, %arg1: memref<16x8x16xf32, #tpu.memory_space<vmem>>, %arg2: memref<16x32xf32, #tpu.memory_space<vmem>>, %arg3: memref<1x32xf32, #tpu.memory_space<vmem>>, %arg4: memref<16x8x64xf32, #tpu.memory_space<vmem>>) attributes {dimension_semantics = [#tpu.dimension_semantics<parallel>], iteration_bounds = array<i64: 4>, scalar_prefetch = 0 : i64, scratch_operands = 0 : i64, tpu.core_type = #tpu.core_type<tc>, window_params = [{transform_indices = @transform_0, window_bounds = array<i64: 16, 8, 16>}, {pipeline_mode = #tpu.pipeline_mode<synchronous>, transform_indices = @transform_1, window_bounds = array<i64: 16, 32>}, {pipeline_mode = #tpu.pipeline_mode<synchronous>, transform_indices = @transform_2, window_bounds = array<i64: 1, 32>}, {transform_indices = @transform_3, window_bounds = array<i64: 16, 8, 64>}]} {
    %c0 = arith.constant 0 : index
    %c0_0 = arith.constant 0 : index
    %c0_1 = arith.constant 0 : index
    %0 = vector.load %arg1[%c0, %c0_0, %c0_1] : memref<16x8x16xf32, #tpu.memory_space<vmem>>, vector<16x8x16xf32>
    %1 = vector.shape_cast %0 : vector<16x8x16xf32> to vector<128x16xf32>
    %c0_2 = arith.constant 0 : index
    %c0_3 = arith.constant 0 : index
    %2 = vector.load %arg2[%c0_2, %c0_3] : memref<16x32xf32, #tpu.memory_space<vmem>>, vector<16x32xf32>
    %cst = arith.constant dense<0.000000e+00> : vector<128x32xf32>
    %3 = tpu.matmul %1, %2, %cst {dimension_numbers = #tpu.dot_dimension_numbers<[1], [0], [0], [1], [0, 0, 1, 1], [], []>} : vector<128x16xf32>, vector<16x32xf32>, vector<128x32xf32> -> vector<128x32xf32>
    %c0_4 = arith.constant 0 : index
    %c0_5 = arith.constant 0 : index
    %4 = vector.load %arg3[%c0_4, %c0_5] : memref<1x32xf32, #tpu.memory_space<vmem>>, vector<1x32xf32>
    %5 = vector.broadcast %4 : vector<1x32xf32> to vector<128x32xf32>
    %6 = arith.addf %3, %5 : vector<128x32xf32>
    %cst_6 = arith.constant 0.000000e+00 : f32
    %7 = vector.broadcast %cst_6 : f32 to vector<128x32xf32>
    %8 = arith.maximumf %6, %7 : vector<128x32xf32>
    %9 = vector.shape_cast %8 : vector<128x32xf32> to vector<16x8x32xf32>
    %cst_7 = arith.constant dense<0xFF800000> : vector<16x32xf32>
    %10 = vector.multi_reduction <maximumf>, %9, %cst_7 [1] : vector<16x8x32xf32> to vector<16x32xf32>
    %11 = vector.shape_cast %10 : vector<16x32xf32> to vector<16x1x32xf32>
    %12 = vector.shape_cast %11 : vector<16x1x32xf32> to vector<16x1x32xf32>
    %13 = vector.broadcast %12 : vector<16x1x32xf32> to vector<16x8x32xf32>
    %c0_8 = arith.constant 0 : index
    %c0_9 = arith.constant 0 : index
    %c0_10 = arith.constant 0 : index
    %14 = vector.load %arg4[%c0_8, %c0_9, %c0_10] : memref<16x8x64xf32, #tpu.memory_space<vmem>>, vector<16x8x32xf32>
    tpu.vector_store %arg4[%c0_8, %c0_9, %c0_10], %9 {strides = array<i32>} : memref<16x8x64xf32, #tpu.memory_space<vmem>>, vector<16x8x32xf32>,
    %c0_11 = arith.constant 0 : index
    %c0_12 = arith.constant 0 : index
    %c32 = arith.constant 32 : index
    %15 = vector.load %arg4[%c0_11, %c0_12, %c32] : memref<16x8x64xf32, #tpu.memory_space<vmem>>, vector<16x8x32xf32>
    tpu.vector_store %arg4[%c0_11, %c0_12, %c32], %13 {strides = array<i32>} : memref<16x8x64xf32, #tpu.memory_space<vmem>>, vector<16x8x32xf32>,
    return
  }
  func.func @transform_0(%arg0: i32) -> (i32, i32, i32) {
    %c0_i32 = arith.constant 0 : i32
    %c0_i32_0 = arith.constant 0 : i32
    %c0_i32_1 = arith.constant 0 : i32
    return %arg0, %c0_i32, %c0_i32_0 : i32, i32, i32
  }
  func.func @transform_1(%arg0: i32) -> (i32, i32) {
    %c0_i32 = arith.constant 0 : i32
    %c0_i32_0 = arith.constant 0 : i32
    %c0_i32_1 = arith.constant 0 : i32
    return %c0_i32, %c0_i32_0 : i32, i32
  }
  func.func @transform_2(%arg0: i32) -> (i32, i32) {
    %c0_i32 = arith.constant 0 : i32
    %c0_i32_0 = arith.constant 0 : i32
    %c0_i32_1 = arith.constant 0 : i32
    return %c0_i32, %c0_i32_0 : i32, i32
  }
  func.func @transform_3(%arg0: i32) -> (i32, i32, i32) {
    %c0_i32 = arith.constant 0 : i32
    %c0_i32_0 = arith.constant 0 : i32
    %c0_i32_1 = arith.constant 0 : i32
    return %arg0, %c0_i32, %c0_i32_0 : i32, i32, i32
  }
}

</mosaic_0001>

<llo_original>
// kernel: tpu_custom_call.1
$region0: #{tpu_custom_call.1}
  #allocation0 [shape = 'u32[]', space=smem, size = 0x4, offset = 0x4, fixed_abs, tag = 'smem constant byte address 0x4 - core index']
  #allocation1 [shape = 'u32[72,128]{1,0:T(1,128)}', space=vmem, size = 0x9000, scoped, tag = 'internal scratch']
  %s0 = inlined_call_operand.vmem [shape: f32[64,8,16], index: 0, kind: input, shape index: {}]
  %s1 = inlined_call_operand.vmem [shape: f32[16,32], index: 1, kind: input, shape index: {}]
  %s2 = inlined_call_operand.vmem [shape: f32[1,32], index: 2, kind: input, shape index: {}]
  %s3 = inlined_call_operand.hbm [shape: f32[64,8,64], index: 3, kind: output, shape index: {}]
  %s4 = sld [smem:[#allocation0]]
  $region45: #{tpu_custom_call.1} parent=0
    _
  %s6 = ssub.s32 1, %s4
  %s7 = scalar_select 0, %s6, %s4
  $region1: #{tpu_custom_call.1} parent=0
    #allocation2 [shape = 'u8[131072]{0}', space=vmem, size = 0x20000, scoped, tag = 'output window, operand 0']
    #allocation3 [shape = 's32[2]{0}', space=sflag, size = 0x8, scoped, tag = 'scoped memory for tpu_custom_call.1']
    %8 = vsyncpa [#allocation3], 0
    %s9 = scalar_lea.sflag [#allocation3], 1
    %10 = vsyncpa %s9, 0
    loop: start=0, step=1, limit=6
    $region2: #{tpu_custom_call.1} parent=1 // loop_pre_header
      _
    $region3: #{tpu_custom_call.1} parent=1 // loop_header
      %s12 = sphi 0, %s16
      %p13 = scmp.ge.s32.totalorder %s12, 6
      %s22 = sphi 0, %s24
      %s25 = sphi 0, %s22
      %s26 = sphi 0, %s25
      %s42 = sphi 0, %s26
      %s46 = sphi 0, %s46
      %s48 = sphi 0, %s46
      %s49 = sphi 0, %s48
      %s63 = sphi 0, %s49
      %s67 = sphi 0, %s67
      %s69 = sphi 0, %s67
      %s70 = sphi 0, %s69
      %s84 = sphi 0, %s70
      %s90 = sphi 0, %s92
      %s93 = sphi 0, %s90
      %s94 = sphi 0, %s93
      %s110 = sphi 0, %s94
    $region4: #{tpu_custom_call.1} parent=1 // loop_header_branch
      %15 = sbr.rel (%p13) target = $region8
    $region5: #{tpu_custom_call.1} parent=1 // loop_body
      %s17 = ssub.s32 %s12, 1
      %s18 = ssub.s32 %s12, 2
      %s19 = sadd.s32 %s12, 1
      %s20 = ssub.s32 %s12, %s19
      %p21 = scmp.eq.s32.totalorder %s20, 0
      %s23 = sadd.s32 %s22, 1
      %s24 = scalar_select %p21, %s22, %s23
      %p27 = pneg %p21
      %p28 = scmp.eq.s32.totalorder %s12, 3
      %p29 = por %p27, %p28
      %p30 = scmp.ne.s32.totalorder %s22, %s25
      %p31 = scmp.eq.s32.totalorder %s12, 0
      %p32 = por %p30, %p31
      %p33 = scmp.ne.s32.totalorder %s22, %s25
      %p34 = scmp.eq.s32.totalorder %s17, 3
      %p35 = por %p33, %p34
      %p36 = scmp.ne.s32.totalorder %s25, %s26
      %p37 = scmp.eq.s32.totalorder %s17, 0
      %p38 = por %p36, %p37
      %p39 = scmp.ne.s32.totalorder %s25, %s26
      %p40 = scmp.eq.s32.totalorder %s18, 3
      %p41 = por %p39, %p40
      %p43 = scmp.ne.s32.totalorder %s26, %s42
      %p44 = scmp.eq.s32.totalorder %s18, 0
      %p45 = por %p43, %p44
      %s47 = sadd.s32 %s46, 1
      %p50 = scmp.eq.s32.totalorder %s12, 3
      %p51 = scmp.ne.s32.totalorder %s46, %s48
      %p52 = scmp.eq.s32.totalorder %s12, 0
      %p53 = por %p51, %p52
      %p54 = scmp.ne.s32.totalorder %s46, %s48
      %p55 = scmp.eq.s32.totalorder %s17, 3
      %p56 = por %p54, %p55
      %p57 = scmp.ne.s32.totalorder %s48, %s49
      %p58 = scmp.eq.s32.totalorder %s17, 0
      %p59 = por %p57, %p58
      %p60 = scmp.ne.s32.totalorder %s48, %s49
      %p61 = scmp.eq.s32.totalorder %s18, 3
      %p62 = por %p60, %p61
      %p64 = scmp.ne.s32.totalorder %s49, %s63
      %p65 = scmp.eq.s32.totalorder %s18, 0
      %p66 = por %p64, %p65
      %s68 = sadd.s32 %s67, 1
      %p71 = scmp.eq.s32.totalorder %s12, 3
      %p72 = scmp.ne.s32.totalorder %s67, %s69
      %p73 = scmp.eq.s32.totalorder %s12, 0
      %p74 = por %p72, %p73
      %p75 = scmp.ne.s32.totalorder %s67, %s69
      %p76 = scmp.eq.s32.totalorder %s17, 3
      %p77 = por %p75, %p76
      %p78 = scmp.ne.s32.totalorder %s69, %s70
      %p79 = scmp.eq.s32.totalorder %s17, 0
      %p80 = por %p78, %p79
      %p81 = scmp.ne.s32.totalorder %s69, %s70
      %p82 = scmp.eq.s32.totalorder %s18, 3
      %p83 = por %p81, %p82
      %p85 = scmp.ne.s32.totalorder %s70, %s84
      %p86 = scmp.eq.s32.totalorder %s18, 0
      %p87 = por %p85, %p86
      %s88 = ssub.s32 %s12, %s19
      %p89 = scmp.eq.s32.totalorder %s88, 0
      %s91 = sadd.s32 %s90, 1
      %s92 = scalar_select %p89, %s90, %s91
      %p95 = pneg %p89
      %p96 = scmp.eq.s32.totalorder %s12, 3
      %p97 = por %p95, %p96
      %p98 = scmp.ne.s32.totalorder %s90, %s93
      %p99 = scmp.eq.s32.totalorder %s12, 0
      %p100 = por %p98, %p99
      %p101 = scmp.ne.s32.totalorder %s90, %s93
      %p102 = scmp.eq.s32.totalorder %s17, 3
      %p103 = por %p101, %p102
      %p104 = scmp.ne.s32.totalorder %s93, %s94
      %p105 = scmp.eq.s32.totalorder %s17, 0
      %p106 = por %p104, %p105
      %p107 = scmp.ne.s32.totalorder %s93, %s94
      %p108 = scmp.eq.s32.totalorder %s18, 3
      %p109 = por %p107, %p108
      %p111 = scmp.ne.s32.totalorder %s94, %s110
      %p112 = scmp.eq.s32.totalorder %s18, 0
      %p113 = por %p111, %p112
      %p114 = scmp.le.s32.totalorder 1, %s12
      %p115 = scmp.lt.s32.totalorder %s12, 5
      %p116 = pnand %p114, %p115
      %p117 = pneg %p116
      // Predicated region
      $region9: #{tpu_custom_call.1} parent=5 // pred_check
        _
      $region10: #{tpu_custom_call.1} parent=5 // pred_check_branch
        %119 = sbr.rel (%p116) target = $region12
      $region11: #{tpu_custom_call.1} parent=5 // pred_region
        %s120 = ssub.s32 %s12, 1
        // Predicated region
        $region13: #{tpu_custom_call.1} parent=11 // pred_check
          %p121 = pneg %p59
        $region14: #{tpu_custom_call.1} parent=11 // pred_check_branch
          %123 = sbr.rel (%p121) target = $region16
        $region15: #{tpu_custom_call.1} parent=11 // pred_region
          _
        $region16: #{tpu_custom_call.1} parent=11 // pred_fallthru
          _
        // Predicated region
        $region17: #{tpu_custom_call.1} parent=11 // pred_check
          %p124 = pneg %p80
        $region18: #{tpu_custom_call.1} parent=11 // pred_check_branch
          %126 = sbr.rel (%p124) target = $region20
        $region19: #{tpu_custom_call.1} parent=11 // pred_region
          _
        $region20: #{tpu_custom_call.1} parent=11 // pred_fallthru
          _
      $region12: #{tpu_custom_call.1} parent=5 // pred_fallthru
        _
      %p127 = scmp.lt.s32.totalorder %s12, 4
      // Predicated region
      $region21: #{tpu_custom_call.1} parent=5 // pred_check
        %p128 = pneg %p127
      $region22: #{tpu_custom_call.1} parent=5 // pred_check_branch
        %130 = sbr.rel (%p128) target = $region24
      $region23: #{tpu_custom_call.1} parent=5 // pred_region
        // Predicated region
        $region25: #{tpu_custom_call.1} parent=23 // pred_check
          %p131 = pneg %p32
        $region26: #{tpu_custom_call.1} parent=23 // pred_check_branch
          %133 = sbr.rel (%p131) target = $region28
        $region27: #{tpu_custom_call.1} parent=23 // pred_region
          %s134 = smul.u32 16, %s12
          %p135 = scmp.lt.s32.totalorder %s134, 63
          %s136 = scalar_select %p135, %s134, 63
          %s137 = smul.addr %s136, 8
          %s138 = scalar_lea.vmem %s0, %s137
          %s139 = smul.u32 16, %s12
        $region28: #{tpu_custom_call.1} parent=23 // pred_fallthru
          _
      $region24: #{tpu_custom_call.1} parent=5 // pred_fallthru
        _
      %p140 = scmp.le.s32.totalorder 1, %s12
      %p141 = scmp.lt.s32.totalorder %s12, 5
      %p142 = pnand %p140, %p141
      %p143 = pneg %p142
      // Predicated region
      $region29: #{tpu_custom_call.1} parent=5 // pred_check
        _
      $region30: #{tpu_custom_call.1} parent=5 // pred_check_branch
        %145 = sbr.rel (%p142) target = $region32
      $region31: #{tpu_custom_call.1} parent=5 // pred_region
        %s146 = ssub.s32 %s12, 1
        %s147 = smul.u32 16, %s17
        %p148 = scmp.lt.s32.totalorder %s147, 63
        %s149 = scalar_select %p148, %s147, 63
        %s150 = smul.addr %s149, 8
        %s151 = scalar_lea.vmem %s0, %s150
        %p152 = pneg %p38
        %p153 = pneg %p35
        %p154 = pneg %p59
        %p155 = pneg %p56
        %p156 = pneg %p80
        %p157 = pneg %p77
        %p158 = pneg %p106
        %p159 = pneg %p103
        %s160 = sand.u32 %s93, 1
        %s161 = scalar_lea.sflag [#allocation3], %s160
        %s162 = sand.u32 %s93, 1
        %s163 = smul.addr %s162, 128
        %s164 = scalar_lea.vmem [#allocation2], %s163
        %s165 = smul.u32 16, %s17
        %p166 = scmp.lt.s32.totalorder %s165, 63
        %s167 = scalar_select %p166, %s165, 63
        %s168 = smul.addr %s167, 8
        %s169 = scalar_lea.vmem %s0, %s168
        %s170 = smul.u32 16, %s17
        %s171 = smul.u32 16, %s17
        %v172 = vld [vmem:[%s169] sm:$0xff]
        %v173 = vld [vmem:[%s169 + $0x8] sm:$0xff]
        %v174 = vld [vmem:[%s169 + $0x10] sm:$0xff]
        %v175 = vld [vmem:[%s169 + $0x18] sm:$0xff]
        %v176 = vld [vmem:[%s169 + $0x20] sm:$0xff]
        %v177 = vld [vmem:[%s169 + $0x28] sm:$0xff]
        %v178 = vld [vmem:[%s169 + $0x30] sm:$0xff]
        %v179 = vld [vmem:[%s169 + $0x38] sm:$0xff]
        %v180 = vld [vmem:[%s169 + $0x40] sm:$0xff]
        %v181 = vld [vmem:[%s169 + $0x48] sm:$0xff]
        %v182 = vld [vmem:[%s169 + $0x50] sm:$0xff]
        %v183 = vld [vmem:[%s169 + $0x58] sm:$0xff]
        %v184 = vld [vmem:[%s169 + $0x60] sm:$0xff]
        %v185 = vld [vmem:[%s169 + $0x68] sm:$0xff]
        %v186 = vld [vmem:[%s169 + $0x70] sm:$0xff]
        %v187 = vld [vmem:[%s169 + $0x78] sm:$0xff]
        %v188 = vld [vmem:[%s1] sm:$0xff]
        %v189 = vld [vmem:[%s1 + $0x8] sm:$0xff]
        %v190 = vld [vmem:[%s2] sm:$0x1]
        %v192 = vperm.slane %v190, 0
        %vm194 = vcmask 130048
        %v196 = vsel %vm194, %v172, 0
        %v199 = vsel %vm194, %v173, 0
        %v202 = vsel %vm194, %v174, 0
        %v205 = vsel %vm194, %v175, 0
        %v208 = vsel %vm194, %v176, 0
        %v211 = vsel %vm194, %v177, 0
        %v214 = vsel %vm194, %v178, 0
        %v217 = vsel %vm194, %v179, 0
        %v220 = vsel %vm194, %v180, 0
        %v223 = vsel %vm194, %v181, 0
        %v226 = vsel %vm194, %v182, 0
        %v229 = vsel %vm194, %v183, 0
        %v232 = vsel %vm194, %v184, 0
        %v235 = vsel %vm194, %v185, 0
        %v238 = vsel %vm194, %v186, 0
        %v241 = vsel %vm194, %v187, 0
        %243 = vmatpush.msra.mxu0 0.0
        %244 = vmatpush.msra.mxu0 0.0
        %245 = vmatpush.msra.mxu0 0.0
        %246 = vmatpush.msra.mxu0 0.0
        %247 = vmatpush.msra.mxu0 0.0
        %248 = vmatpush.msra.mxu0 0.0
        %249 = vmatpush.msra.mxu0 0.0
        %250 = vmatpush.msra.mxu0 0.0
        %251 = vmatpush.msra.mxu0 0.0
        %252 = vmatpush.msra.mxu0 0.0
        %253 = vmatpush.msra.mxu0 0.0
        %254 = vmatpush.msra.mxu0 0.0
        %255 = vmatpush.msra.mxu0 0.0
        %256 = vmatpush.msra.mxu0 0.0
        %257 = vmatpush.msra.mxu0 %v189
        %258 = vmatpush.msra.mxu0 %v188
        %259 = vmatmul.f32.gmra.mxu0 %v196
        %v260 = vpop.f32.mrf.mxu0
        %v261 = vadd.f32 %v192, %v260
        %262 = vmatmul.f32.gmra.mxu0 %v199
        %v263 = vpop.f32.mrf.mxu0
        %v264 = vadd.f32 %v192, %v263
        %265 = vmatmul.f32.gmra.mxu0 %v202
        %v266 = vpop.f32.mrf.mxu0
        %v267 = vadd.f32 %v192, %v266
        %268 = vmatmul.f32.gmra.mxu0 %v205
        %v269 = vpop.f32.mrf.mxu0
        %v270 = vadd.f32 %v192, %v269
        %271 = vmatmul.f32.gmra.mxu0 %v208
        %v272 = vpop.f32.mrf.mxu0
        %v273 = vadd.f32 %v192, %v272
        %274 = vmatmul.f32.gmra.mxu0 %v211
        %v275 = vpop.f32.mrf.mxu0
        %v276 = vadd.f32 %v192, %v275
        %277 = vmatmul.f32.gmra.mxu0 %v214
        %v278 = vpop.f32.mrf.mxu0
        %v279 = vadd.f32 %v192, %v278
        %280 = vmatmul.f32.gmra.mxu0 %v217
        %v281 = vpop.f32.mrf.mxu0
        %v282 = vadd.f32 %v192, %v281
        %283 = vmatmul.f32.gmra.mxu0 %v220
        %v284 = vpop.f32.mrf.mxu0
        %v285 = vadd.f32 %v192, %v284
        %286 = vmatmul.f32.gmra.mxu0 %v223
        %v287 = vpop.f32.mrf.mxu0
        %v288 = vadd.f32 %v192, %v287
        %289 = vmatmul.f32.gmra.mxu0 %v226
        %v290 = vpop.f32.mrf.mxu0
        %v291 = vadd.f32 %v192, %v290
        %292 = vmatmul.f32.gmra.mxu0 %v229
        %v293 = vpop.f32.mrf.mxu0
        %v294 = vadd.f32 %v192, %v293
        %295 = vmatmul.f32.gmra.mxu0 %v232
        %v296 = vpop.f32.mrf.mxu0
        %v297 = vadd.f32 %v192, %v296
        %298 = vmatmul.f32.gmra.mxu0 %v235
        %v299 = vpop.f32.mrf.mxu0
        %v300 = vadd.f32 %v192, %v299
        %301 = vmatmul.f32.gmra.mxu0 %v238
        %v302 = vpop.f32.mrf.mxu0
        %v303 = vadd.f32 %v192, %v302
        %304 = vmatmul.f32.gmra.mxu0 %v241
        %v305 = vpop.f32.mrf.mxu0
        %v306 = vadd.f32 %v192, %v305
        %307 = vdwg.mxu0
        %v308 = vmax.f32 %v261, 0.0
        %v309 = vmax.f32 %v264, 0.0
        %v310 = vmax.f32 %v267, 0.0
        %v311 = vmax.f32 %v270, 0.0
        %v312 = vmax.f32 %v273, 0.0
        %v313 = vmax.f32 %v276, 0.0
        %v314 = vmax.f32 %v279, 0.0
        %v315 = vmax.f32 %v282, 0.0
        %v316 = vmax.f32 %v285, 0.0
        %v317 = vmax.f32 %v288, 0.0
        %v318 = vmax.f32 %v291, 0.0
        %v319 = vmax.f32 %v294, 0.0
        %v320 = vmax.f32 %v297, 0.0
        %v321 = vmax.f32 %v300, 0.0
        %v322 = vmax.f32 %v303, 0.0
        %v323 = vmax.f32 %v306, 0.0
        %vm324 = vcmask 261120
        %v325 = vsel %vm324, %v308, -inf
        %v326 = vrot.slane %v325, 4
        %v327 = vmax.f32 %v325, %v326
        %v328 = vrot.slane %v327, 2
        %v329 = vmax.f32 %v327, %v328
        %v330 = vrot.slane %v329, 1
        %v331 = vmax.f32 %v329, %v330
        %v332 = vsel %vm324, %v309, -inf
        %v333 = vrot.slane %v332, 4
        %v334 = vmax.f32 %v332, %v333
        %v335 = vrot.slane %v334, 2
        %v336 = vmax.f32 %v334, %v335
        %v337 = vrot.slane %v336, 1
        %v338 = vmax.f32 %v336, %v337
        %v339 = vsel %vm324, %v310, -inf
        %v340 = vrot.slane %v339, 4
        %v341 = vmax.f32 %v339, %v340
        %v342 = vrot.slane %v341, 2
        %v343 = vmax.f32 %v341, %v342
        %v344 = vrot.slane %v343, 1
        %v345 = vmax.f32 %v343, %v344
        %v346 = vsel %vm324, %v311, -inf
        %v347 = vrot.slane %v346, 4
        %v348 = vmax.f32 %v346, %v347
        %v349 = vrot.slane %v348, 2
        %v350 = vmax.f32 %v348, %v349
        %v351 = vrot.slane %v350, 1
        %v352 = vmax.f32 %v350, %v351
        %v353 = vsel %vm324, %v312, -inf
        %v354 = vrot.slane %v353, 4
        %v355 = vmax.f32 %v353, %v354
        %v356 = vrot.slane %v355, 2
        %v357 = vmax.f32 %v355, %v356
        %v358 = vrot.slane %v357, 1
        %v359 = vmax.f32 %v357, %v358
        %v360 = vsel %vm324, %v313, -inf
        %v361 = vrot.slane %v360, 4
        %v362 = vmax.f32 %v360, %v361
        %v363 = vrot.slane %v362, 2
        %v364 = vmax.f32 %v362, %v363
        %v365 = vrot.slane %v364, 1
        %v366 = vmax.f32 %v364, %v365
        %v367 = vsel %vm324, %v314, -inf
        %v368 = vrot.slane %v367, 4
        %v369 = vmax.f32 %v367, %v368
        %v370 = vrot.slane %v369, 2
        %v371 = vmax.f32 %v369, %v370
        %v372 = vrot.slane %v371, 1
        %v373 = vmax.f32 %v371, %v372
        %v374 = vsel %vm324, %v315, -inf
        %v375 = vrot.slane %v374, 4
        %v376 = vmax.f32 %v374, %v375
        %v377 = vrot.slane %v376, 2
        %v378 = vmax.f32 %v376, %v377
        %v379 = vrot.slane %v378, 1
        %v380 = vmax.f32 %v378, %v379
        %v381 = vsel %vm324, %v316, -inf
        %v382 = vrot.slane %v381, 4
        %v383 = vmax.f32 %v381, %v382
        %v384 = vrot.slane %v383, 2
        %v385 = vmax.f32 %v383, %v384
        %v386 = vrot.slane %v385, 1
        %v387 = vmax.f32 %v385, %v386
        %v388 = vsel %vm324, %v317, -inf
        %v389 = vrot.slane %v388, 4
        %v390 = vmax.f32 %v388, %v389
        %v391 = vrot.slane %v390, 2
        %v392 = vmax.f32 %v390, %v391
        %v393 = vrot.slane %v392, 1
        %v394 = vmax.f32 %v392, %v393
        %v395 = vsel %vm324, %v318, -inf
        %v396 = vrot.slane %v395, 4
        %v397 = vmax.f32 %v395, %v396
        %v398 = vrot.slane %v397, 2
        %v399 = vmax.f32 %v397, %v398
        %v400 = vrot.slane %v399, 1
        %v401 = vmax.f32 %v399, %v400
        %v402 = vsel %vm324, %v319, -inf
        %v403 = vrot.slane %v402, 4
        %v404 = vmax.f32 %v402, %v403
        %v405 = vrot.slane %v404, 2
        %v406 = vmax.f32 %v404, %v405
        %v407 = vrot.slane %v406, 1
        %v408 = vmax.f32 %v406, %v407
        %v409 = vsel %vm324, %v320, -inf
        %v410 = vrot.slane %v409, 4
        %v411 = vmax.f32 %v409, %v410
        %v412 = vrot.slane %v411, 2
        %v413 = vmax.f32 %v411, %v412
        %v414 = vrot.slane %v413, 1
        %v415 = vmax.f32 %v413, %v414
        %v416 = vsel %vm324, %v321, -inf
        %v417 = vrot.slane %v416, 4
        %v418 = vmax.f32 %v416, %v417
        %v419 = vrot.slane %v418, 2
        %v420 = vmax.f32 %v418, %v419
        %v421 = vrot.slane %v420, 1
        %v422 = vmax.f32 %v420, %v421
        %v423 = vsel %vm324, %v322, -inf
        %v424 = vrot.slane %v423, 4
        %v425 = vmax.f32 %v423, %v424
        %v426 = vrot.slane %v425, 2
        %v427 = vmax.f32 %v425, %v426
        %v428 = vrot.slane %v427, 1
        %v429 = vmax.f32 %v427, %v428
        %v430 = vsel %vm324, %v323, -inf
        %v431 = vrot.slane %v430, 4
        %v432 = vmax.f32 %v430, %v431
        %v433 = vrot.slane %v432, 2
        %v434 = vmax.f32 %v432, %v433
        %v435 = vrot.slane %v434, 1
        %v436 = vmax.f32 %v434, %v435
        %437 = vst.msk [vmem:[%s164] sm:$0xff] %vm324, %v308
        %438 = vst.msk [vmem:[%s164 + $0x8] sm:$0xff] %vm324, %v309
        %439 = vst.msk [vmem:[%s164 + $0x10] sm:$0xff] %vm324, %v310
        %440 = vst.msk [vmem:[%s164 + $0x18] sm:$0xff] %vm324, %v311
        %441 = vst.msk [vmem:[%s164 + $0x20] sm:$0xff] %vm324, %v312
        %442 = vst.msk [vmem:[%s164 + $0x28] sm:$0xff] %vm324, %v313
        %443 = vst.msk [vmem:[%s164 + $0x30] sm:$0xff] %vm324, %v314
        %444 = vst.msk [vmem:[%s164 + $0x38] sm:$0xff] %vm324, %v315
        %445 = vst.msk [vmem:[%s164 + $0x40] sm:$0xff] %vm324, %v316
        %446 = vst.msk [vmem:[%s164 + $0x48] sm:$0xff] %vm324, %v317
        %447 = vst.msk [vmem:[%s164 + $0x50] sm:$0xff] %vm324, %v318
        %448 = vst.msk [vmem:[%s164 + $0x58] sm:$0xff] %vm324, %v319
        %449 = vst.msk [vmem:[%s164 + $0x60] sm:$0xff] %vm324, %v320
        %450 = vst.msk [vmem:[%s164 + $0x68] sm:$0xff] %vm324, %v321
        %451 = vst.msk [vmem:[%s164 + $0x70] sm:$0xff] %vm324, %v322
        %452 = vst.msk [vmem:[%s164 + $0x78] sm:$0xff] %vm324, %v323
        %469 = vrot.lane.b32.xlu0 %v331, 32
        %v470 = vpop.permute.xlu0 %469
        %471 = vrot.lane.b32.xlu0 %v338, 32
        %v472 = vpop.permute.xlu0 %471
        %473 = vrot.lane.b32.xlu0 %v345, 32
        %v474 = vpop.permute.xlu0 %473
        %475 = vrot.lane.b32.xlu0 %v352, 32
        %v476 = vpop.permute.xlu0 %475
        %477 = vrot.lane.b32.xlu0 %v359, 32
        %v478 = vpop.permute.xlu0 %477
        %479 = vrot.lane.b32.xlu0 %v366, 32
        %v480 = vpop.permute.xlu0 %479
        %481 = vrot.lane.b32.xlu0 %v373, 32
        %v482 = vpop.permute.xlu0 %481
        %483 = vrot.lane.b32.xlu0 %v380, 32
        %v484 = vpop.permute.xlu0 %483
        %485 = vrot.lane.b32.xlu0 %v387, 32
        %v486 = vpop.permute.xlu0 %485
        %487 = vrot.lane.b32.xlu0 %v394, 32
        %v488 = vpop.permute.xlu0 %487
        %489 = vrot.lane.b32.xlu0 %v401, 32
        %v490 = vpop.permute.xlu0 %489
        %491 = vrot.lane.b32.xlu0 %v408, 32
        %v492 = vpop.permute.xlu0 %491
        %493 = vrot.lane.b32.xlu0 %v415, 32
        %v494 = vpop.permute.xlu0 %493
        %495 = vrot.lane.b32.xlu0 %v422, 32
        %v496 = vpop.permute.xlu0 %495
        %497 = vrot.lane.b32.xlu0 %v429, 32
        %v498 = vpop.permute.xlu0 %497
        %499 = vrot.lane.b32.xlu0 %v436, 32
        %v500 = vpop.permute.xlu0 %499
        %vm517 = vcmask 523520
        %518 = vst.msk [vmem:[%s164] sm:$0xff] %vm517, %v470
        %519 = vst.msk [vmem:[%s164 + $0x8] sm:$0xff] %vm517, %v472
        %520 = vst.msk [vmem:[%s164 + $0x10] sm:$0xff] %vm517, %v474
        %521 = vst.msk [vmem:[%s164 + $0x18] sm:$0xff] %vm517, %v476
        %522 = vst.msk [vmem:[%s164 + $0x20] sm:$0xff] %vm517, %v478
        %523 = vst.msk [vmem:[%s164 + $0x28] sm:$0xff] %vm517, %v480
        %524 = vst.msk [vmem:[%s164 + $0x30] sm:$0xff] %vm517, %v482
        %525 = vst.msk [vmem:[%s164 + $0x38] sm:$0xff] %vm517, %v484
        %526 = vst.msk [vmem:[%s164 + $0x40] sm:$0xff] %vm517, %v486
        %527 = vst.msk [vmem:[%s164 + $0x48] sm:$0xff] %vm517, %v488
        %528 = vst.msk [vmem:[%s164 + $0x50] sm:$0xff] %vm517, %v490
        %529 = vst.msk [vmem:[%s164 + $0x58] sm:$0xff] %vm517, %v492
        %530 = vst.msk [vmem:[%s164 + $0x60] sm:$0xff] %vm517, %v494
        %531 = vst.msk [vmem:[%s164 + $0x68] sm:$0xff] %vm517, %v496
        %532 = vst.msk [vmem:[%s164 + $0x70] sm:$0xff] %vm517, %v498
        %533 = vst.msk [vmem:[%s164 + $0x78] sm:$0xff] %vm517, %v500
        %s534 = sand.u32 %s93, 1
        %s535 = scalar_lea.sflag [#allocation3], %s534
        %s536 = sand.u32 %s93, 1
        %s537 = smul.addr %s536, 128
        %s538 = scalar_lea.vmem [#allocation2], %s537
        // Predicated region
        $region33: #{tpu_custom_call.1} parent=31 // pred_check
          %p539 = pneg %p103
        $region34: #{tpu_custom_call.1} parent=31 // pred_check_branch
          %541 = sbr.rel (%p539) target = $region36
        $region35: #{tpu_custom_call.1} parent=31 // pred_region
          %s542 = smul.u32 16, %s17
          %544 = vsyncadd %s535, 0
          %s545 = smul.addr %s542, 8
          %s546 = scalar_lea.hbm %s3, %s545
          %s547 = sshll.u32 %s538, 4
          %s548 = int_to_ptr.vmem [resolvable:$true] %s547
          %s549 = sshll.u32 %s546, 4
          %s550 = int_to_ptr.hbm [resolvable:$true] %s549
          %555 = dma.vmem_to_hbm [thread:$0]  %s548, 2048, %s550, %s535, 128, 128, 8
        $region36: #{tpu_custom_call.1} parent=31 // pred_fallthru
          _
      $region32: #{tpu_custom_call.1} parent=5 // pred_fallthru
        _
      %p556 = scmp.le.s32.totalorder 2, %s12
      // Predicated region
      $region37: #{tpu_custom_call.1} parent=5 // pred_check
        %p557 = pneg %p556
      $region38: #{tpu_custom_call.1} parent=5 // pred_check_branch
        %559 = sbr.rel (%p557) target = $region40
      $region39: #{tpu_custom_call.1} parent=5 // pred_region
        %s560 = ssub.s32 %s12, 2
        // Predicated region
        $region41: #{tpu_custom_call.1} parent=39 // pred_check
          %p561 = pneg %p109
        $region42: #{tpu_custom_call.1} parent=39 // pred_check_branch
          %563 = sbr.rel (%p561) target = $region44
        $region43: #{tpu_custom_call.1} parent=39 // pred_region
          %s564 = sand.u32 %s94, 1
          %s565 = scalar_lea.sflag [#allocation3], %s564
          %s566 = sand.u32 %s94, 1
          %s567 = smul.addr %s566, 128
          %s568 = scalar_lea.vmem [#allocation2], %s567
          %570 = dma.done %s565, 2048
        $region44: #{tpu_custom_call.1} parent=39 // pred_fallthru
          _
      $region40: #{tpu_custom_call.1} parent=5 // pred_fallthru
        _
    $region6: #{tpu_custom_call.1} parent=1 // loop_footer
      %s16 = sadd.s32 1, %s12
    $region7: #{tpu_custom_call.1} parent=1 // loop_footer_branch
      %11 = sbr.rel target = $region3
    $region8: #{tpu_custom_call.1} parent=1 // loop_exit
      _
    %571 = vsyncpa [#allocation3], 1
    %s572 = scalar_lea.sflag [#allocation3], 1
    %573 = vsyncpa %s572, 1

</llo_original>
